<compile_context>
chip_gen: v7x
topology: tpu7x:2x2x1
jax: 0.10.0
libtpu: 0.0.40
codegen_flags: <defaults>
</compile_context>

<pallas_src>
import numpy as np
import jax
import jax.numpy as jnp
from jax.experimental import pallas as pl
from jax.experimental.pallas import tpu as pltpu

UPPER = 100.0
LOWER = -100.0


def _pick_tile(n, max_tile, quantum):
    """Largest t <= max_tile that divides n and is quantum-aligned (or t == n)."""
    for cand in range(min(n, max_tile), 0, -1):
        if n % cand == 0 and (cand % quantum == 0 or cand == n):
            return cand
    # TODO(synk): no aligned divisor <= max_tile -> fall back to a full-dim block
    # (fine for small/medium dims; huge un-tileable dims would need zero padding).
    return n


def _compiler_params(dims, vmem_needed_bytes):
    kw = dict(dimension_semantics=dims)
    # Scoped-VMEM defaults are 16 MiB (v5e) / 32 MiB (v6e, v7x); only raise the
    # limit when the chosen tiles actually need it.
    if vmem_needed_bytes > (24 << 20):
        kw["vmem_limit_bytes"] = int(min(vmem_needed_bytes * 5 // 4 + (4 << 20),
                                         100 << 20))
    return pltpu.CompilerParams(**kw)


# ---------------------------------------------------------------------------
# Kernel 1: encoder (q_theta MLP -> fused mu|logsigma -> KL + softmax(theta))
#   grid = (B // tm, V // tk); batch "parallel", vocab "arbitrary".
#   Output: one lane-dense slab per batch tile: [theta | per-sample KL broadcast]
# ---------------------------------------------------------------------------
def _encoder_kernel(x_ref, w1_ref, b1_ref, w2_ref, b2_ref, wmuls_ref, bmuls_ref,
                    out_ref, acc_ref):
    kj = pl.program_id(1)

    @pl.when(kj == 0)
    def _():
        acc_ref[...] = jnp.zeros(acc_ref.shape, acc_ref.dtype)

    # In-kernel bf16 cast of the norm_bows tile (no extra wrapper HBM pass);
    # bf16 operands, f32 accumulation on the MXU.
    x = x_ref[...].astype(jnp.bfloat16)
    acc_ref[...] += jnp.dot(x, w1_ref[...], preferred_element_type=jnp.float32)

    @pl.when(kj == pl.num_programs(1) - 1)
    def _():
        h = jnp.tanh(acc_ref[...] + b1_ref[...])
        h = jnp.tanh(jnp.dot(h, w2_ref[...],
                             preferred_element_type=jnp.float32) + b2_ref[...])
        # fused [mu | logsigma] projection: (tm, 2K)
        muls = jnp.dot(h, wmuls_ref[...],
                       preferred_element_type=jnp.float32) + bmuls_ref[...]
        k = wmuls_ref.shape[1] // 2
        mu = muls[:, :k]
        ls = muls[:, k:]
        # set_bounds(logsigma, upper, lower)
        ls = jnp.where(ls >= LOWER, ls, LOWER)
        ls = jnp.where(ls <= UPPER, ls, UPPER)
        # per-sample KL (matches reference; exp(ls) can overflow for extreme
        # logsigma exactly as the PyTorch reference would)
        kl_ps = -0.5 * jnp.sum(1.0 + ls - mu * mu - jnp.exp(ls),
                               axis=-1, keepdims=True)                # (tm, 1)
        # eval-mode reparameterize: z = mu ; theta = softmax(z, -1)
        m = jnp.max(mu, axis=-1, keepdims=True)
        e = jnp.exp(mu - m)
        theta = e / jnp.sum(e, axis=-1, keepdims=True)                # (tm, K)
        # single lane-dense output slab: theta in lanes [0, K), KL in the rest
        out_w = out_ref.shape[1]
        out_ref[...] = jnp.concatenate(
            [theta, jnp.broadcast_to(kl_ps, (theta.shape[0], out_w - k))], axis=1)


def encode_theta(norm_bows, w1_bf16, b1, w2, b2, wmuls, bmuls, *,
                 max_tm=256, max_tk=1024):
    B, V = norm_bows.shape
    H = int(w1_bf16.shape[1])
    K = int(wmuls.shape[1]) // 2
    tm = _pick_tile(B, max_tm, 8)
    tk = _pick_tile(V, max_tk, 128)
    out_w = 128 * ((K + 1 + 127) // 128)
    grid = (B // tm, V // tk)

    in_specs = [
        pl.BlockSpec((tm, tk), lambda bi, kj: (bi, kj)),      # norm_bows tile (f32)
        pl.BlockSpec((tk, H), lambda bi, kj: (kj, 0)),        # w1 tile (bf16)
        pl.BlockSpec((1, H), lambda bi, kj: (0, 0)),          # b1
        pl.BlockSpec((H, H), lambda bi, kj: (0, 0)),          # w2
        pl.BlockSpec((1, H), lambda bi, kj: (0, 0)),          # b2
        pl.BlockSpec((H, 2 * K), lambda bi, kj: (0, 0)),      # [wmu|wls]
        pl.BlockSpec((1, 2 * K), lambda bi, kj: (0, 0)),      # [bmu|bls]
    ]
    out_specs = pl.BlockSpec((tm, out_w), lambda bi, kj: (bi, 0))
    out_shape = jax.ShapeDtypeStruct((B, out_w), jnp.float32)

    need = (2 * tm * tk * 4 + 2 * tk * H * 2 + 4 * H * 4 + 2 * H * H * 4
            + 2 * H * 2 * K * 4 + 2 * 2 * K * 4 + 2 * tm * out_w * 4 + tm * H * 4)
    cost = pl.CostEstimate(
        flops=int(2 * B * V * H + 2 * B * H * H + 2 * B * H * (2 * K)),
        transcendentals=int(B * (2 * H + 3 * K)),
        bytes_accessed=int(B * V * 4 + (B // tm) * V * H * 2 + H * H * 4
                           + H * 2 * K * 4 + B * out_w * 4))

    slab = pl.pallas_call(
        _encoder_kernel,
        out_shape=out_shape,
        grid=grid,
        in_specs=in_specs,
        out_specs=out_specs,
        scratch_shapes=[pltpu.VMEM((tm, H), jnp.float32)],
        compiler_params=_compiler_params(("parallel", "arbitrary"), need),
        cost_estimate=cost,
    )(norm_bows, w1_bf16, b1, w2, b2, wmuls, bmuls)

    theta = slab[:, :K]
    kl_rows = slab[:, K]
    return theta, kl_rows


# ---------------------------------------------------------------------------
# Kernel 2: decode over the GLOBAL vocab (all code types in one sweep).
#   grid = (pass, vocab_tile), both "arbitrary".
#   pass 0: per-code logits from rho/alpha (static row masks), cache in VMEM,
#           online per-code max M[c,k] / normalizer Z[c,k]
#   pass 1: beta tile = exp(cached_logit - M[code(row)]) * (1/Z[code(row)]);
#           res = theta @ beta^T ; nll += sum(log(res+1e-6) * bows_tile)
# ---------------------------------------------------------------------------
def _make_decode_kernel(partition):
    n_code = len(partition) - 1

    def kernel(theta_ref, rho_ref, alpha_ref, bows_ref, out_ref,
               logit_cache, m_sc, z_sc, zinv_sc, nll_sc):
        p = pl.program_id(0)
        vt = pl.program_id(1)
        n_vt = pl.num_programs(1)
        tk = rho_ref.shape[0]
        bsz = theta_ref.shape[0]
        k = theta_ref.shape[1]

        # global vocab row index of each tile row, and static per-code row masks
        row = vt * tk + jax.lax.broadcasted_iota(jnp.int32, (tk, 1), 0)
        masks = [jnp.logical_and(row >= partition[c], row < partition[c + 1])
                 for c in range(n_code)]

        @pl.when(jnp.logical_and(p == 0, vt == 0))
        def _():
            m_sc[...] = jnp.full(m_sc.shape, -1e30, m_sc.dtype)
            z_sc[...] = jnp.zeros(z_sc.shape, z_sc.dtype)
            nll_sc[...] = jnp.zeros(nll_sc.shape, nll_sc.dtype)

        @pl.when(p == 0)
        def _():
            rho_tile = rho_ref[...]
            logit = jnp.full((tk, k), -1e30, jnp.float32)
            for c in range(n_code):
                lc = jnp.dot(rho_tile, alpha_ref[c],
                             preferred_element_type=jnp.float32)      # (tk, K)
                logit = jnp.where(masks[c], lc, logit)
            logit_cache[vt] = logit                                    # reuse in pass 1

            # online per-code softmax stats over the vocab axis
            m_old = m_sc[...]                                          # (n_code, K)
            tile_max = jnp.concatenate(
                [jnp.max(jnp.where(masks[c], logit, -1e30), axis=0, keepdims=True)
                 for c in range(n_code)], axis=0)                      # (n_code, K)
            m_new = jnp.maximum(m_old, tile_max)
            m_sel = jnp.zeros((tk, k), jnp.float32)
            for c in range(n_code):
                m_sel = jnp.where(masks[c], m_new[c:c + 1, :], m_sel)
            e0 = jnp.exp(logit - m_sel)                                # single exp
            tile_sum = jnp.concatenate(
                [jnp.sum(jnp.where(masks[c], e0, 0.0), axis=0, keepdims=True)
                 for c in range(n_code)], axis=0)                      # (n_code, K)
            z_sc[...] = z_sc[...] * jnp.exp(m_old - m_new) + tile_sum
            m_sc[...] = m_new

        @pl.when(jnp.logical_and(p == 1, vt == 0))
        def _():
            # hoisted once per forward: 1/Z on the EUP
            zinv_sc[...] = pl.reciprocal(z_sc[...], approx=True)

        @pl.when(p == 1)
        def _():
            logit = logit_cache[vt]
            m_all = m_sc[...]
            zi_all = zinv_sc[...]
            m_sel = jnp.zeros((tk, k), jnp.float32)
            zi_sel = jnp.zeros((tk, k), jnp.float32)
            for c in range(n_code):
                m_sel = jnp.where(masks[c], m_all[c:c + 1, :], m_sel)
                zi_sel = jnp.where(masks[c], zi_all[c:c + 1, :], zi_sel)
            beta_t = jnp.exp(logit - m_sel) * zi_sel                   # (tk, K)
            res = jax.lax.dot_general(
                theta_ref[...], beta_t,
                dimension_numbers=(((1,), (1,)), ((), ())),
                preferred_element_type=jnp.float32)                    # (B, tk)
            preds = jnp.log(res + 1e-6)
            nll_sc[...] += jnp.sum(preds * bows_ref[...], axis=0, keepdims=True)

        @pl.when(jnp.logical_and(p == 1, vt == n_vt - 1))
        def _():
            total = jnp.sum(nll_sc[...])
            out_ref[...] = jnp.broadcast_to(-total * (1.0 / bsz), out_ref.shape)

    return kernel


def decode_all(theta, rho, alphas_stk, bows, vocab_sizes, *, max_tk=512):
    """Returns recon_loss = sum over code types of nll_c (bows read once, unpadded)."""
    B, K = theta.shape
    Vtot, R = rho.shape
    n_code = int(alphas_stk.shape[0])
    partition = tuple(int(x) for x in np.cumsum([0] + list(vocab_sizes)))
    assert partition[-1] == Vtot and bows.shape == (B, Vtot)

    tk = _pick_tile(Vtot, max_tk, 128)
    n_vt = Vtot // tk
    kernel = _make_decode_kernel(partition)

    need = (2 * B * K * 4 + 2 * tk * R * 4 + 2 * n_code * R * K * 4
            + 2 * B * tk * 4 + 2 * 8 * 128 * 4
            + n_vt * tk * K * 4 + 3 * n_code * K * 4 + tk * 4)
    cost = pl.CostEstimate(
        flops=int(2 * n_code * Vtot * R * K + 2 * B * Vtot * K),
        transcendentals=int(2 * Vtot * K + B * Vtot),
        bytes_accessed=int(Vtot * R * 4 + B * Vtot * 4 + B * K * 4
                           + n_code * R * K * 4 + Vtot * K * 4))

    out = pl.pallas_call(
        kernel,
        out_shape=jax.ShapeDtypeStruct((8, 128), jnp.float32),
        grid=(2, n_vt),
        in_specs=[
            pl.BlockSpec((B, K), lambda p, vt: (0, 0)),              # theta (resident)
            pl.BlockSpec((tk, R), lambda p, vt: (vt * (1 - p), 0)),  # rho: stream p0, pinned p1
            pl.BlockSpec((n_code, R, K), lambda p, vt: (0, 0, 0)),   # alphas (resident)
            pl.BlockSpec((B, tk), lambda p, vt: (0, vt * p)),        # bows: pinned p0, stream p1
        ],
        out_specs=pl.BlockSpec((8, 128), lambda p, vt: (0, 0)),
        scratch_shapes=[
            pltpu.VMEM((n_vt, tk, K), jnp.float32),   # cached logits (pass0 -> pass1)
            pltpu.VMEM((n_code, K), jnp.float32),     # running max M[c, k]
            pltpu.VMEM((n_code, K), jnp.float32),     # running normalizer Z[c, k]
            pltpu.VMEM((n_code, K), jnp.float32),     # 1 / Z
            pltpu.VMEM((1, tk), jnp.float32),         # per-lane nll partials
        ],
        compiler_params=_compiler_params(("arbitrary", "arbitrary"), need),
        cost_estimate=cost,
    )(theta, rho, alphas_stk, bows)
    return out[0, 0]


# ---------------------------------------------------------------------------
# GETM forward (glue in plain JAX, hot paths in the Pallas kernels above)
# ---------------------------------------------------------------------------
def prepare_params(params, code_types):
    """Param-only prep (hoist out of the per-step forward)."""
    return {
        "w1": params["w1"].astype(jnp.bfloat16),
        "b1": params["b1"],
        "w2": params["w2"],
        "b2": params["b2"],
        "wmuls": jnp.concatenate([params["wmu"], params["wls"]], axis=1),
        "bmuls": jnp.concatenate([params["bmu"], params["bls"]], axis=1),
        "rho": params["gcn_embed"],                                   # GCNet output
        "alphas": jnp.stack([params["alphas"][c] for c in code_types], axis=0),
    }


def getm_forward(prep, bows, norm_bows, vocab_sizes, *,
                 enc_max_tm=256, enc_max_tk=1024, dec_max_tk=512):
    theta, kl_rows = encode_theta(
        norm_bows, prep["w1"], prep["b1"], prep["w2"], prep["b2"],
        prep["wmuls"], prep["bmuls"], max_tm=enc_max_tm, max_tk=enc_max_tk)
    kld_theta = jnp.mean(kl_rows)
    recon_loss = decode_all(theta, prep["rho"], prep["alphas"], bows,
                            vocab_sizes, max_tk=dec_max_tk)
    return recon_loss, kld_theta


# ---------------------------------------------------------------------------
# Pure-JAX reference (sanity check)
# ---------------------------------------------------------------------------
def getm_forward_ref(params, bows, norm_bows, code_types, vocab_sizes):
    h = jnp.tanh(norm_bows @ params["w1"] + params["b1"])
    h = jnp.tanh(h @ params["w2"] + params["b2"])
    mu = h @ params["wmu"] + params["bmu"]
    ls = jnp.clip(h @ params["wls"] + params["bls"], LOWER, UPPER)
    kld = jnp.mean(-0.5 * jnp.sum(1.0 + ls - mu**2 - jnp.exp(ls), axis=-1))
    theta = jax.nn.softmax(mu, axis=-1)
    partition = np.cumsum([0] + list(vocab_sizes))
    total = 0.0
    for i, c in enumerate(code_types):
        rho_c = params["gcn_embed"][partition[i]:partition[i + 1]]
        logit = rho_c @ params["alphas"][c]
        beta = jax.nn.softmax(logit, axis=0).T
        res = theta @ beta
        preds = jnp.log(res + 1e-6)
        bows_c = bows[:, partition[i]:partition[i + 1]]
        total = total + jnp.mean(-jnp.sum(preds * bows_c, axis=1))
    return total, kld


if __name__ == "__main__":
    # Small, forward-consistent shapes that still exercise the tiled grids:
    # encoder grid (2 batch tiles, 2 vocab tiles), decode grid (2 passes, 2 tiles)
    B = 16                              # batch
    code_types = ["icd", "med"]         # two code types
    vocab_sizes = [256, 256]            # per-type vocab
    V = sum(vocab_sizes)                # total vocab = GCN num_nodes
    H = 64                              # t_hidden_size
    K = 16                              # num_topics
    R = 32                              # rho_size

    key = jax.random.PRNGKey(0)
    ks = jax.random.split(key, 12)

    def init_w(k, shape, scale=0.05):
        return (scale * jax.random.normal(k, shape)).astype(jnp.float32)

    params = {
        # q_theta MLP (weights stored [in, out])
        "w1": init_w(ks[0], (V, H)),
        "b1": init_w(ks[1], (1, H)),
        "w2": init_w(ks[2], (H, H)),
        "b2": init_w(ks[3], (1, H)),
        "wmu": init_w(ks[4], (H, K)),
        "bmu": init_w(ks[5], (1, K)),
        "wls": init_w(ks[6], (H, K)),
        "bls": init_w(ks[7], (1, K)),
        # GCNet output == nn.Embedding(num_nodes, rho_size).weight ~ N(0, 1)
        "gcn_embed": jax.random.normal(ks[8], (V, R)).astype(jnp.float32),
        # per-code-type alpha: nn.Linear(rho_size, num_topics, bias=False),
        # stored pre-transposed as (R, K)
        "alphas": {
            "icd": init_w(ks[9], (R, K), scale=0.5),
            "med": init_w(ks[10], (R, K), scale=0.5),
        },
    }

    bows = jax.random.uniform(ks[11], (B, V), minval=0.0, maxval=5.0).astype(jnp.float32)
    norm_bows = bows / jnp.sum(bows, axis=1, keepdims=True)

    prep = prepare_params(params, code_types)   # param-only, hoisted out of the step

    # Small max tiles here so the test exercises multi-tile grids; production
    # defaults (enc_max_tm=256, enc_max_tk=1024, dec_max_tk=512) are larger.
    recon_loss, kld_theta = getm_forward(prep, bows, norm_bows, vocab_sizes,
                                         enc_max_tm=8, enc_max_tk=256,
                                         dec_max_tk=256)
    jax.block_until_ready((recon_loss, kld_theta))

    ref_recon, ref_kld = getm_forward_ref(params, bows, norm_bows,
                                          code_types, vocab_sizes)
    # bf16 encoder matmul operands (f32 accumulation) -> 2e-2 tolerance
    np.testing.assert_allclose(np.array(recon_loss), np.array(ref_recon),
                               rtol=2e-2, atol=2e-2)
    np.testing.assert_allclose(np.array(kld_theta), np.array(ref_kld),
                               rtol=2e-2, atol=2e-2)

    print("KERNEL_OK")
</pallas_src>

<mosaic_0001>
module attributes {stable_mosaic.version = 11 : i64} {
  func.func @_encoder_kernel(%arg0: i32, %arg1: i32, %arg2: memref<8x256xf32, #tpu.memory_space<vmem>>, %arg3: memref<256x64xbf16, #tpu.memory_space<vmem>>, %arg4: memref<1x64xf32, #tpu.memory_space<vmem>>, %arg5: memref<64x64xf32, #tpu.memory_space<vmem>>, %arg6: memref<1x64xf32, #tpu.memory_space<vmem>>, %arg7: memref<64x32xf32, #tpu.memory_space<vmem>>, %arg8: memref<1x32xf32, #tpu.memory_space<vmem>>, %arg9: memref<8x128xf32, #tpu.memory_space<vmem>>, %arg10: memref<8x64xf32, #tpu.memory_space<vmem>>) attributes {dimension_semantics = [#tpu.dimension_semantics<parallel>, #tpu.dimension_semantics<arbitrary>], iteration_bounds = array<i64: 2, 2>, scalar_prefetch = 0 : i64, scratch_operands = 1 : i64, tpu.core_type = #tpu.core_type<tc>, window_params = [{transform_indices = @transform_0, window_bounds = array<i64: 8, 256>}, {transform_indices = @transform_1, window_bounds = array<i64: 256, 64>}, {pipeline_mode = #tpu.pipeline_mode<synchronous>, transform_indices = @transform_2, window_bounds = array<i64: 1, 64>}, {pipeline_mode = #tpu.pipeline_mode<synchronous>, transform_indices = @transform_3, window_bounds = array<i64: 64, 64>}, {pipeline_mode = #tpu.pipeline_mode<synchronous>, transform_indices = @transform_4, window_bounds = array<i64: 1, 64>}, {pipeline_mode = #tpu.pipeline_mode<synchronous>, transform_indices = @transform_5, window_bounds = array<i64: 64, 32>}, {pipeline_mode = #tpu.pipeline_mode<synchronous>, transform_indices = @transform_6, window_bounds = array<i64: 1, 32>}, {transform_indices = @transform_7, window_bounds = array<i64: 8, 128>}]} {
    %c0_i32 = arith.constant 0 : i32
    %0 = arith.cmpi eq, %arg1, %c0_i32 : i32
    %1 = arith.extui %0 : i1 to i32
    %c0_i32_0 = arith.constant 0 : i32
    %2 = arith.cmpi ne, %1, %c0_i32_0 : i32
    scf.if %2 {
      %cst_9 = arith.constant 0.000000e+00 : f32
      %13 = vector.broadcast %cst_9 : f32 to vector<8x64xf32>
      %c0_10 = arith.constant 0 : index
      %c0_11 = arith.constant 0 : index
      %14 = vector.load %arg10[%c0_10, %c0_11] : memref<8x64xf32, #tpu.memory_space<vmem>>, vector<8x64xf32>
      tpu.vector_store %arg10[%c0_10, %c0_11], %13 {strides = array<i32>} : memref<8x64xf32, #tpu.memory_space<vmem>>, vector<8x64xf32>,
    } else {
    }
    %c0 = arith.constant 0 : index
    %c0_1 = arith.constant 0 : index
    %3 = vector.load %arg2[%c0, %c0_1] : memref<8x256xf32, #tpu.memory_space<vmem>>, vector<8x256xf32>
    %4 = arith.truncf %3 : vector<8x256xf32> to vector<8x256xbf16>
    %c0_2 = arith.constant 0 : index
    %c0_3 = arith.constant 0 : index
    %5 = vector.load %arg10[%c0_2, %c0_3] : memref<8x64xf32, #tpu.memory_space<vmem>>, vector<8x64xf32>
    %c0_4 = arith.constant 0 : index
    %c0_5 = arith.constant 0 : index
    %6 = vector.load %arg3[%c0_4, %c0_5] : memref<256x64xbf16, #tpu.memory_space<vmem>>, vector<256x64xbf16>
    %cst = arith.constant dense<0.000000e+00> : vector<8x64xf32>
    %7 = tpu.matmul %4, %6, %cst {dimension_numbers = #tpu.dot_dimension_numbers<[1], [0], [0], [1], [0, 0, 1, 1], [], []>} : vector<8x256xbf16>, vector<256x64xbf16>, vector<8x64xf32> -> vector<8x64xf32>
    %8 = arith.addf %5, %7 : vector<8x64xf32>
    %c0_6 = arith.constant 0 : index
    %c0_7 = arith.constant 0 : index
    %9 = vector.load %arg10[%c0_6, %c0_7] : memref<8x64xf32, #tpu.memory_space<vmem>>, vector<8x64xf32>
    tpu.vector_store %arg10[%c0_6, %c0_7], %8 {strides = array<i32>} : memref<8x64xf32, #tpu.memory_space<vmem>>, vector<8x64xf32>,
    %c1_i32 = arith.constant 1 : i32
    %10 = arith.cmpi eq, %arg1, %c1_i32 : i32
    %11 = arith.extui %10 : i1 to i32
    %c0_i32_8 = arith.constant 0 : i32
    %12 = arith.cmpi ne, %11, %c0_i32_8 : i32
    scf.if %12 {
      %c0_9 = arith.constant 0 : index
      %c0_10 = arith.constant 0 : index
      %13 = vector.load %arg10[%c0_9, %c0_10] : memref<8x64xf32, #tpu.memory_space<vmem>>, vector<8x64xf32>
      %c0_11 = arith.constant 0 : index
      %c0_12 = arith.constant 0 : index
      %14 = vector.load %arg4[%c0_11, %c0_12] : memref<1x64xf32, #tpu.memory_space<vmem>>, vector<1x64xf32>
      %15 = vector.broadcast %14 : vector<1x64xf32> to vector<8x64xf32>
      %16 = arith.addf %13, %15 : vector<8x64xf32>
      %17 = math.tanh %16 : vector<8x64xf32>
      %c0_13 = arith.constant 0 : index
      %c0_14 = arith.constant 0 : index
      %18 = vector.load %arg5[%c0_13, %c0_14] : memref<64x64xf32, #tpu.memory_space<vmem>>, vector<64x64xf32>
      %cst_15 = arith.constant dense<0.000000e+00> : vector<8x64xf32>
      %19 = tpu.matmul %17, %18, %cst_15 {dimension_numbers = #tpu.dot_dimension_numbers<[1], [0], [0], [1], [0, 0, 1, 1], [], []>} : vector<8x64xf32>, vector<64x64xf32>, vector<8x64xf32> -> vector<8x64xf32>
      %c0_16 = arith.constant 0 : index
      %c0_17 = arith.constant 0 : index
      %20 = vector.load %arg6[%c0_16, %c0_17] : memref<1x64xf32, #tpu.memory_space<vmem>>, vector<1x64xf32>
      %21 = vector.broadcast %20 : vector<1x64xf32> to vector<8x64xf32>
      %22 = arith.addf %19, %21 : vector<8x64xf32>
      %23 = math.tanh %22 : vector<8x64xf32>
      %c0_18 = arith.constant 0 : index
      %c0_19 = arith.constant 0 : index
      %24 = vector.load %arg7[%c0_18, %c0_19] : memref<64x32xf32, #tpu.memory_space<vmem>>, vector<64x32xf32>
      %cst_20 = arith.constant dense<0.000000e+00> : vector<8x32xf32>
      %25 = tpu.matmul %23, %24, %cst_20 {dimension_numbers = #tpu.dot_dimension_numbers<[1], [0], [0], [1], [0, 0, 1, 1], [], []>} : vector<8x64xf32>, vector<64x32xf32>, vector<8x32xf32> -> vector<8x32xf32>
      %c0_21 = arith.constant 0 : index
      %c0_22 = arith.constant 0 : index
      %26 = vector.load %arg8[%c0_21, %c0_22] : memref<1x32xf32, #tpu.memory_space<vmem>>, vector<1x32xf32>
      %27 = vector.broadcast %26 : vector<1x32xf32> to vector<8x32xf32>
      %28 = arith.addf %25, %27 : vector<8x32xf32>
      %29 = vector.extract_strided_slice %28 {offsets = [0, 0], sizes = [8, 16], strides = [1, 1]} : vector<8x32xf32> to vector<8x16xf32>
      %30 = vector.extract_strided_slice %28 {offsets = [0, 16], sizes = [8, 16], strides = [1, 1]} : vector<8x32xf32> to vector<8x16xf32>
      %cst_23 = arith.constant -1.000000e+02 : f32
      %31 = vector.broadcast %cst_23 : f32 to vector<8x16xf32>
      %32 = arith.cmpf oge, %30, %31 : vector<8x16xf32>
      %cst_24 = arith.constant -1.000000e+02 : f32
      %33 = vector.broadcast %cst_24 : f32 to vector<8x16xf32>
      %34 = arith.select %32, %30, %33 : vector<8x16xi1>, vector<8x16xf32>
      %cst_25 = arith.constant 1.000000e+02 : f32
      %35 = vector.broadcast %cst_25 : f32 to vector<8x16xf32>
      %36 = arith.cmpf ole, %34, %35 : vector<8x16xf32>
      %cst_26 = arith.constant 1.000000e+02 : f32
      %37 = vector.broadcast %cst_26 : f32 to vector<8x16xf32>
      %38 = arith.select %36, %34, %37 : vector<8x16xi1>, vector<8x16xf32>
      %cst_27 = arith.constant 1.000000e+00 : f32
      %39 = vector.broadcast %cst_27 : f32 to vector<8x16xf32>
      %40 = arith.addf %39, %38 : vector<8x16xf32>
      %41 = arith.mulf %29, %29 : vector<8x16xf32>
      %42 = arith.subf %40, %41 : vector<8x16xf32>
      %43 = math.exp %38 : vector<8x16xf32>
      %44 = arith.subf %42, %43 : vector<8x16xf32>
      %cst_28 = arith.constant dense<0.000000e+00> : vector<8xf32>
      %45 = vector.multi_reduction <add>, %44, %cst_28 [1] : vector<8x16xf32> to vector<8xf32>
      %46 = vector.shape_cast %45 : vector<8xf32> to vector<8x1xf32>
      %cst_29 = arith.constant -5.000000e-01 : f32
      %47 = vector.broadcast %cst_29 : f32 to vector<8x1xf32>
      %48 = arith.mulf %47, %46 : vector<8x1xf32>
      %cst_30 = arith.constant dense<0xFF800000> : vector<8xf32>
      %49 = vector.multi_reduction <maximumf>, %29, %cst_30 [1] : vector<8x16xf32> to vector<8xf32>
      %50 = vector.shape_cast %49 : vector<8xf32> to vector<8x1xf32>
      %51 = vector.broadcast %50 : vector<8x1xf32> to vector<8x16xf32>
      %52 = arith.subf %29, %51 : vector<8x16xf32>
      %53 = math.exp %52 : vector<8x16xf32>
      %cst_31 = arith.constant dense<0.000000e+00> : vector<8xf32>
      %54 = vector.multi_reduction <add>, %53, %cst_31 [1] : vector<8x16xf32> to vector<8xf32>
      %55 = vector.shape_cast %54 : vector<8xf32> to vector<8x1xf32>
      %56 = vector.broadcast %55 : vector<8x1xf32> to vector<8x16xf32>
      %57 = arith.divf %53, %56 : vector<8x16xf32>
      %58 = vector.shape_cast %48 : vector<8x1xf32> to vector<8x1xf32>
      %59 = vector.broadcast %58 : vector<8x1xf32> to vector<8x112xf32>
      %60 = tpu.concatenate %57, %59 in 1 : vector<8x16xf32>, vector<8x112xf32> -> vector<8x128xf32>
      %c0_32 = arith.constant 0 : index
      %c0_33 = arith.constant 0 : index
      %61 = vector.load %arg9[%c0_32, %c0_33] : memref<8x128xf32, #tpu.memory_space<vmem>>, vector<8x128xf32>
      tpu.vector_store %arg9[%c0_32, %c0_33], %60 {strides = array<i32>} : memref<8x128xf32, #tpu.memory_space<vmem>>, vector<8x128xf32>,
    } else {
    }
    return
  }
  func.func @transform_0(%arg0: i32, %arg1: i32) -> (i32, i32) {
    %c0_i32 = arith.constant 0 : i32
    return %arg0, %arg1 : i32, i32
  }
  func.func @transform_1(%arg0: i32, %arg1: i32) -> (i32, i32) {
    %c0_i32 = arith.constant 0 : i32
    %c0_i32_0 = arith.constant 0 : i32
    return %arg1, %c0_i32 : i32, i32
  }
  func.func @transform_2(%arg0: i32, %arg1: i32) -> (i32, i32) {
    %c0_i32 = arith.constant 0 : i32
    %c0_i32_0 = arith.constant 0 : i32
    %c0_i32_1 = arith.constant 0 : i32
    return %c0_i32, %c0_i32_0 : i32, i32
  }
  func.func @transform_3(%arg0: i32, %arg1: i32) -> (i32, i32) {
    %c0_i32 = arith.constant 0 : i32
    %c0_i32_0 = arith.constant 0 : i32
    %c0_i32_1 = arith.constant 0 : i32
    return %c0_i32, %c0_i32_0 : i32, i32
  }
  func.func @transform_4(%arg0: i32, %arg1: i32) -> (i32, i32) {
    %c0_i32 = arith.constant 0 : i32
    %c0_i32_0 = arith.constant 0 : i32
    %c0_i32_1 = arith.constant 0 : i32
    return %c0_i32, %c0_i32_0 : i32, i32
  }
  func.func @transform_5(%arg0: i32, %arg1: i32) -> (i32, i32) {
    %c0_i32 = arith.constant 0 : i32
    %c0_i32_0 = arith.constant 0 : i32
    %c0_i32_1 = arith.constant 0 : i32
    return %c0_i32, %c0_i32_0 : i32, i32
  }
  func.func @transform_6(%arg0: i32, %arg1: i32) -> (i32, i32) {
    %c0_i32 = arith.constant 0 : i32
    %c0_i32_0 = arith.constant 0 : i32
    %c0_i32_1 = arith.constant 0 : i32
    return %c0_i32, %c0_i32_0 : i32, i32
  }
  func.func @transform_7(%arg0: i32, %arg1: i32) -> (i32, i32) {
    %c0_i32 = arith.constant 0 : i32
    %c0_i32_0 = arith.constant 0 : i32
    return %arg0, %c0_i32 : i32, i32
  }
}

</mosaic_0001>

<llo_original>
// kernel: tpu_custom_call.1
$region0: #{tpu_custom_call.1}
  #allocation0 [shape = 'u32[]', space=smem, size = 0x4, offset = 0x4, fixed_abs, tag = 'smem constant byte address 0x4 - core index']
  #allocation1 [shape = 'u32[144,128]{1,0:T(1,128)}', space=vmem, size = 0x12000, scoped, tag = 'internal scratch']
  #allocation2 [shape = 'f32[8,64]{1,0:T(8,128)}', space=vmem, size = 0x1000, scoped, tag = 'scratch operand']
  %s0 = inlined_call_operand.vmem [shape: f32[16,512], index: 0, kind: input, shape index: {}]
  %s1 = inlined_call_operand.vmem [shape: bf16[512,64], index: 1, kind: input, shape index: {}]
  %s2 = inlined_call_operand.vmem [shape: f32[1,64], index: 2, kind: input, shape index: {}]
  %s3 = inlined_call_operand.vmem [shape: f32[64,64], index: 3, kind: input, shape index: {}]
  %s4 = inlined_call_operand.vmem [shape: f32[1,64], index: 4, kind: input, shape index: {}]
  %s5 = inlined_call_operand.vmem [shape: f32[64,32], index: 5, kind: input, shape index: {}]
  %s6 = inlined_call_operand.vmem [shape: f32[1,32], index: 6, kind: input, shape index: {}]
  %s7 = inlined_call_operand.hbm [shape: f32[16,128], index: 7, kind: output, shape index: {}]
  %s8 = sld [smem:[#allocation0]]
  $region69: #{tpu_custom_call.1} parent=0
    _
  %s10 = ssub.s32 1, %s8
  %s11 = scalar_select 0, %s10, %s8
  $region1: #{tpu_custom_call.1} parent=0
    #allocation3 [shape = 'u8[8192]{0}', space=vmem, size = 0x2000, scoped, tag = 'output window, operand 0']
    #allocation4 [shape = 's32[2]{0}', space=sflag, size = 0x8, scoped, tag = 'scoped memory for tpu_custom_call.1']
    %12 = vsyncpa [#allocation4], 0
    %s13 = scalar_lea.sflag [#allocation4], 1
    %14 = vsyncpa %s13, 0
    loop: start=0, step=1, limit=6
    $region2: #{tpu_custom_call.1} parent=1 // loop_pre_header
      _
    $region3: #{tpu_custom_call.1} parent=1 // loop_header
      %s16 = sphi 0, %s20
      %p17 = scmp.ge.s32.totalorder %s16, 6
      %s23 = sphi 0, %s35
      %s24 = sphi 0, %s31
      %s25 = sphi 0, %s23
      %s26 = sphi 0, %s24
      %s27 = sphi 0, %s25
      %s28 = sphi 0, %s26
      %s40 = sphi 0, %s42
      %s43 = sphi 0, %s40
      %s44 = sphi 0, %s43
      %s60 = sphi 0, %s44
      %s66 = sphi 0, %s68
      %s69 = sphi 0, %s66
      %s70 = sphi 0, %s69
      %s86 = sphi 0, %s70
      %s90 = sphi 0, %s90
      %s92 = sphi 0, %s90
      %s93 = sphi 0, %s92
      %s107 = sphi 0, %s93
      %s111 = sphi 0, %s111
      %s113 = sphi 0, %s111
      %s114 = sphi 0, %s113
      %s128 = sphi 0, %s114
      %s132 = sphi 0, %s132
      %s134 = sphi 0, %s132
      %s135 = sphi 0, %s134
      %s149 = sphi 0, %s135
      %s153 = sphi 0, %s153
      %s155 = sphi 0, %s153
      %s156 = sphi 0, %s155
      %s170 = sphi 0, %s156
      %s174 = sphi 0, %s174
      %s176 = sphi 0, %s174
      %s177 = sphi 0, %s176
      %s191 = sphi 0, %s177
      %s197 = sphi 0, %s199
      %s200 = sphi 0, %s197
      %s201 = sphi 0, %s200
      %s217 = sphi 0, %s201
    $region4: #{tpu_custom_call.1} parent=1 // loop_header_branch
      %19 = sbr.rel (%p17) target = $region8
    $region5: #{tpu_custom_call.1} parent=1 // loop_body
      %s21 = ssub.s32 %s16, 1
      %s22 = ssub.s32 %s16, 2
      %s29 = sadd.s32 1, %s24
      %p30 = scmp.ge.s32.totalorder %s29, 2
      %s31 = scalar_select %p30, 0, %s29
      %s32 = sadd.s32 1, %s23
      %s33 = scalar_select %p30, %s32, %s23
      %p34 = scmp.ge.s32.totalorder %s33, 2
      %s35 = scalar_select %p34, 0, %s33
      %s36 = ssub.s32 %s23, %s35
      %s37 = ssub.s32 %s24, %s31
      %s38 = sor.u32 %s36, %s37
      %p39 = scmp.eq.s32.totalorder %s38, 0
      %s41 = sadd.s32 %s40, 1
      %s42 = scalar_select %p39, %s40, %s41
      %p45 = pneg %p39
      %p46 = scmp.eq.s32.totalorder %s16, 3
      %p47 = por %p45, %p46
      %p48 = scmp.ne.s32.totalorder %s40, %s43
      %p49 = scmp.eq.s32.totalorder %s16, 0
      %p50 = por %p48, %p49
      %p51 = scmp.ne.s32.totalorder %s40, %s43
      %p52 = scmp.eq.s32.totalorder %s21, 3
      %p53 = por %p51, %p52
      %p54 = scmp.ne.s32.totalorder %s43, %s44
      %p55 = scmp.eq.s32.totalorder %s21, 0
      %p56 = por %p54, %p55
      %p57 = scmp.ne.s32.totalorder %s43, %s44
      %p58 = scmp.eq.s32.totalorder %s22, 3
      %p59 = por %p57, %p58
      %p61 = scmp.ne.s32.totalorder %s44, %s60
      %p62 = scmp.eq.s32.totalorder %s22, 0
      %p63 = por %p61, %p62
      %s64 = ssub.s32 %s24, %s31
      %p65 = scmp.eq.s32.totalorder %s64, 0
      %s67 = sadd.s32 %s66, 1
      %s68 = scalar_select %p65, %s66, %s67
      %p71 = pneg %p65
      %p72 = scmp.eq.s32.totalorder %s16, 3
      %p73 = por %p71, %p72
      %p74 = scmp.ne.s32.totalorder %s66, %s69
      %p75 = scmp.eq.s32.totalorder %s16, 0
      %p76 = por %p74, %p75
      %p77 = scmp.ne.s32.totalorder %s66, %s69
      %p78 = scmp.eq.s32.totalorder %s21, 3
      %p79 = por %p77, %p78
      %p80 = scmp.ne.s32.totalorder %s69, %s70
      %p81 = scmp.eq.s32.totalorder %s21, 0
      %p82 = por %p80, %p81
      %p83 = scmp.ne.s32.totalorder %s69, %s70
      %p84 = scmp.eq.s32.totalorder %s22, 3
      %p85 = por %p83, %p84
      %p87 = scmp.ne.s32.totalorder %s70, %s86
      %p88 = scmp.eq.s32.totalorder %s22, 0
      %p89 = por %p87, %p88
      %s91 = sadd.s32 %s90, 1
      %p94 = scmp.eq.s32.totalorder %s16, 3
      %p95 = scmp.ne.s32.totalorder %s90, %s92
      %p96 = scmp.eq.s32.totalorder %s16, 0
      %p97 = por %p95, %p96
      %p98 = scmp.ne.s32.totalorder %s90, %s92
      %p99 = scmp.eq.s32.totalorder %s21, 3
      %p100 = por %p98, %p99
      %p101 = scmp.ne.s32.totalorder %s92, %s93
      %p102 = scmp.eq.s32.totalorder %s21, 0
      %p103 = por %p101, %p102
      %p104 = scmp.ne.s32.totalorder %s92, %s93
      %p105 = scmp.eq.s32.totalorder %s22, 3
      %p106 = por %p104, %p105
      %p108 = scmp.ne.s32.totalorder %s93, %s107
      %p109 = scmp.eq.s32.totalorder %s22, 0
      %p110 = por %p108, %p109
      %s112 = sadd.s32 %s111, 1
      %p115 = scmp.eq.s32.totalorder %s16, 3
      %p116 = scmp.ne.s32.totalorder %s111, %s113
      %p117 = scmp.eq.s32.totalorder %s16, 0
      %p118 = por %p116, %p117
      %p119 = scmp.ne.s32.totalorder %s111, %s113
      %p120 = scmp.eq.s32.totalorder %s21, 3
      %p121 = por %p119, %p120
      %p122 = scmp.ne.s32.totalorder %s113, %s114
      %p123 = scmp.eq.s32.totalorder %s21, 0
      %p124 = por %p122, %p123
      %p125 = scmp.ne.s32.totalorder %s113, %s114
      %p126 = scmp.eq.s32.totalorder %s22, 3
      %p127 = por %p125, %p126
      %p129 = scmp.ne.s32.totalorder %s114, %s128
      %p130 = scmp.eq.s32.totalorder %s22, 0
      %p131 = por %p129, %p130
      %s133 = sadd.s32 %s132, 1
      %p136 = scmp.eq.s32.totalorder %s16, 3
      %p137 = scmp.ne.s32.totalorder %s132, %s134
      %p138 = scmp.eq.s32.totalorder %s16, 0
      %p139 = por %p137, %p138
      %p140 = scmp.ne.s32.totalorder %s132, %s134
      %p141 = scmp.eq.s32.totalorder %s21, 3
      %p142 = por %p140, %p141
      %p143 = scmp.ne.s32.totalorder %s134, %s135
      %p144 = scmp.eq.s32.totalorder %s21, 0
      %p145 = por %p143, %p144
      %p146 = scmp.ne.s32.totalorder %s134, %s135
      %p147 = scmp.eq.s32.totalorder %s22, 3
      %p148 = por %p146, %p147
      %p150 = scmp.ne.s32.totalorder %s135, %s149
      %p151 = scmp.eq.s32.totalorder %s22, 0
      %p152 = por %p150, %p151
      %s154 = sadd.s32 %s153, 1
      %p157 = scmp.eq.s32.totalorder %s16, 3
      %p158 = scmp.ne.s32.totalorder %s153, %s155
      %p159 = scmp.eq.s32.totalorder %s16, 0
      %p160 = por %p158, %p159
      %p161 = scmp.ne.s32.totalorder %s153, %s155
      %p162 = scmp.eq.s32.totalorder %s21, 3
      %p163 = por %p161, %p162
      %p164 = scmp.ne.s32.totalorder %s155, %s156
      %p165 = scmp.eq.s32.totalorder %s21, 0
      %p166 = por %p164, %p165
      %p167 = scmp.ne.s32.totalorder %s155, %s156
      %p168 = scmp.eq.s32.totalorder %s22, 3
      %p169 = por %p167, %p168
      %p171 = scmp.ne.s32.totalorder %s156, %s170
      %p172 = scmp.eq.s32.totalorder %s22, 0
      %p173 = por %p171, %p172
      %s175 = sadd.s32 %s174, 1
      %p178 = scmp.eq.s32.totalorder %s16, 3
      %p179 = scmp.ne.s32.totalorder %s174, %s176
      %p180 = scmp.eq.s32.totalorder %s16, 0
      %p181 = por %p179, %p180
      %p182 = scmp.ne.s32.totalorder %s174, %s176
      %p183 = scmp.eq.s32.totalorder %s21, 3
      %p184 = por %p182, %p183
      %p185 = scmp.ne.s32.totalorder %s176, %s177
      %p186 = scmp.eq.s32.totalorder %s21, 0
      %p187 = por %p185, %p186
      %p188 = scmp.ne.s32.totalorder %s176, %s177
      %p189 = scmp.eq.s32.totalorder %s22, 3
      %p190 = por %p188, %p189
      %p192 = scmp.ne.s32.totalorder %s177, %s191
      %p193 = scmp.eq.s32.totalorder %s22, 0
      %p194 = por %p192, %p193
      %s195 = ssub.s32 %s23, %s35
      %p196 = scmp.eq.s32.totalorder %s195, 0
      %s198 = sadd.s32 %s197, 1
      %s199 = scalar_select %p196, %s197, %s198
      %p202 = pneg %p196
      %p203 = scmp.eq.s32.totalorder %s16, 3
      %p204 = por %p202, %p203
      %p205 = scmp.ne.s32.totalorder %s197, %s200
      %p206 = scmp.eq.s32.totalorder %s16, 0
      %p207 = por %p205, %p206
      %p208 = scmp.ne.s32.totalorder %s197, %s200
      %p209 = scmp.eq.s32.totalorder %s21, 3
      %p210 = por %p208, %p209
      %p211 = scmp.ne.s32.totalorder %s200, %s201
      %p212 = scmp.eq.s32.totalorder %s21, 0
      %p213 = por %p211, %p212
      %p214 = scmp.ne.s32.totalorder %s200, %s201
      %p215 = scmp.eq.s32.totalorder %s22, 3
      %p216 = por %p214, %p215
      %p218 = scmp.ne.s32.totalorder %s201, %s217
      %p219 = scmp.eq.s32.totalorder %s22, 0
      %p220 = por %p218, %p219
      %p221 = scmp.le.s32.totalorder 1, %s16
      %p222 = scmp.lt.s32.totalorder %s16, 5
      %p223 = pnand %p221, %p222
      %p224 = pneg %p223
      // Predicated region
      $region9: #{tpu_custom_call.1} parent=5 // pred_check
        _
      $region10: #{tpu_custom_call.1} parent=5 // pred_check_branch
        %226 = sbr.rel (%p223) target = $region12
      $region11: #{tpu_custom_call.1} parent=5 // pred_region
        %s227 = ssub.s32 %s16, 1
        // Predicated region
        $region13: #{tpu_custom_call.1} parent=11 // pred_check
          %p228 = pneg %p103
        $region14: #{tpu_custom_call.1} parent=11 // pred_check_branch
          %230 = sbr.rel (%p228) target = $region16
        $region15: #{tpu_custom_call.1} parent=11 // pred_region
          _
        $region16: #{tpu_custom_call.1} parent=11 // pred_fallthru
          _
        // Predicated region
        $region17: #{tpu_custom_call.1} parent=11 // pred_check
          %p231 = pneg %p124
        $region18: #{tpu_custom_call.1} parent=11 // pred_check_branch
          %233 = sbr.rel (%p231) target = $region20
        $region19: #{tpu_custom_call.1} parent=11 // pred_region
          _
        $region20: #{tpu_custom_call.1} parent=11 // pred_fallthru
          _
        // Predicated region
        $region21: #{tpu_custom_call.1} parent=11 // pred_check
          %p234 = pneg %p145
        $region22: #{tpu_custom_call.1} parent=11 // pred_check_branch
          %236 = sbr.rel (%p234) target = $region24
        $region23: #{tpu_custom_call.1} parent=11 // pred_region
          _
        $region24: #{tpu_custom_call.1} parent=11 // pred_fallthru
          _
        // Predicated region
        $region25: #{tpu_custom_call.1} parent=11 // pred_check
          %p237 = pneg %p166
        $region26: #{tpu_custom_call.1} parent=11 // pred_check_branch
          %239 = sbr.rel (%p237) target = $region28
        $region27: #{tpu_custom_call.1} parent=11 // pred_region
          _
        $region28: #{tpu_custom_call.1} parent=11 // pred_fallthru
          _
        // Predicated region
        $region29: #{tpu_custom_call.1} parent=11 // pred_check
          %p240 = pneg %p187
        $region30: #{tpu_custom_call.1} parent=11 // pred_check_branch
          %242 = sbr.rel (%p240) target = $region32
        $region31: #{tpu_custom_call.1} parent=11 // pred_region
          _
        $region32: #{tpu_custom_call.1} parent=11 // pred_fallthru
          _
      $region12: #{tpu_custom_call.1} parent=5 // pred_fallthru
        _
      %p243 = scmp.lt.s32.totalorder %s16, 4
      // Predicated region
      $region33: #{tpu_custom_call.1} parent=5 // pred_check
        %p244 = pneg %p243
      $region34: #{tpu_custom_call.1} parent=5 // pred_check_branch
        %246 = sbr.rel (%p244) target = $region36
      $region35: #{tpu_custom_call.1} parent=5 // pred_region
        // Predicated region
        $region37: #{tpu_custom_call.1} parent=35 // pred_check
          %p247 = pneg %p50
        $region38: #{tpu_custom_call.1} parent=35 // pred_check_branch
          %249 = sbr.rel (%p247) target = $region40
        $region39: #{tpu_custom_call.1} parent=35 // pred_region
          %s250 = smul.u32 2, %s24
          %p251 = scmp.lt.s32.totalorder %s23, 1
          %s252 = scalar_select %p251, %s23, 1
          %p253 = scmp.lt.s32.totalorder %s250, 3
          %s254 = scalar_select %p253, %s250, 3
          %s255 = smul.addr %s252, 4
          %s256 = sadd.s32 %s254, %s255
          %s257 = smul.addr %s256, 8
          %s258 = scalar_lea.vmem %s0, %s257
          %s259 = smul.u32 2, %s24
        $region40: #{tpu_custom_call.1} parent=35 // pred_fallthru
          _
        // Predicated region
        $region41: #{tpu_custom_call.1} parent=35 // pred_check
          %p260 = pneg %p76
        $region42: #{tpu_custom_call.1} parent=35 // pred_check_branch
          %262 = sbr.rel (%p260) target = $region44
        $region43: #{tpu_custom_call.1} parent=35 // pred_region
          %s263 = smul.u32 32, %s24
          %p264 = scmp.lt.s32.totalorder %s263, 63
          %s265 = scalar_select %p264, %s263, 63
          %s266 = smul.addr %s265, 4
          %s267 = scalar_lea.vmem %s1, %s266
          %s268 = smul.u32 32, %s24
        $region44: #{tpu_custom_call.1} parent=35 // pred_fallthru
          _
      $region36: #{tpu_custom_call.1} parent=5 // pred_fallthru
        _
      %p269 = scmp.le.s32.totalorder 1, %s16
      %p270 = scmp.lt.s32.totalorder %s16, 5
      %p271 = pnand %p269, %p270
      %p272 = pneg %p271
      // Predicated region
      $region45: #{tpu_custom_call.1} parent=5 // pred_check
        _
      $region46: #{tpu_custom_call.1} parent=5 // pred_check_branch
        %274 = sbr.rel (%p271) target = $region48
      $region47: #{tpu_custom_call.1} parent=5 // pred_region
        %s275 = ssub.s32 %s16, 1
        %s276 = smul.u32 2, %s26
        %p277 = scmp.lt.s32.totalorder %s25, 1
        %s278 = scalar_select %p277, %s25, 1
        %p279 = scmp.lt.s32.totalorder %s276, 3
        %s280 = scalar_select %p279, %s276, 3
        %s281 = smul.addr %s278, 4
        %s282 = sadd.s32 %s280, %s281
        %s283 = smul.addr %s282, 8
        %s284 = scalar_lea.vmem %s0, %s283
        %p285 = pneg %p56
        %p286 = pneg %p53
        %s287 = smul.u32 32, %s26
        %p288 = scmp.lt.s32.totalorder %s287, 63
        %s289 = scalar_select %p288, %s287, 63
        %s290 = smul.addr %s289, 4
        %s291 = scalar_lea.vmem %s1, %s290
        %p292 = pneg %p82
        %p293 = pneg %p79
        %p294 = pneg %p103
        %p295 = pneg %p100
        %p296 = pneg %p124
        %p297 = pneg %p121
        %p298 = pneg %p145
        %p299 = pneg %p142
        %p300 = pneg %p166
        %p301 = pneg %p163
        %p302 = pneg %p187
        %p303 = pneg %p184
        %p304 = pneg %p213
        %p305 = pneg %p210
        %s306 = sand.u32 %s200, 1
        %s307 = scalar_lea.sflag [#allocation4], %s306
        %s308 = sand.u32 %s200, 1
        %s309 = smul.addr %s308, 8
        %s310 = scalar_lea.vmem [#allocation3], %s309
        %s311 = smul.u32 2, %s26
        %p312 = scmp.lt.s32.totalorder %s25, 1
        %s313 = scalar_select %p312, %s25, 1
        %p314 = scmp.lt.s32.totalorder %s311, 3
        %s315 = scalar_select %p314, %s311, 3
        %s316 = smul.addr %s313, 4
        %s317 = sadd.s32 %s315, %s316
        %s318 = smul.addr %s317, 8
        %s319 = scalar_lea.vmem %s0, %s318
        %s320 = smul.u32 2, %s26
        %s321 = smul.u32 32, %s26
        %p322 = scmp.lt.s32.totalorder %s321, 63
        %s323 = scalar_select %p322, %s321, 63
        %s324 = smul.addr %s323, 4
        %s325 = scalar_lea.vmem %s1, %s324
        %s326 = smul.u32 32, %s26
        %p328 = scmp.eq.s32.totalorder %s26, 0
        // Predicated region
        $region49: #{tpu_custom_call.1} parent=47 // pred_check
          %p329 = pneg %p328
        $region50: #{tpu_custom_call.1} parent=47 // pred_check_branch
          %331 = sbr.rel (%p329) target = $region52
        $region51: #{tpu_custom_call.1} parent=47 // pred_region
          %vm332 = vcmask 523264
          %333 = vst.msk [vmem:[#allocation2] sm:$0xff] %vm332, 0.0
        $region52: #{tpu_custom_call.1} parent=47 // pred_fallthru
          _
        %v334 = vld [vmem:[%s319] sm:$0xff]
        %v335 = vld [vmem:[%s319 + $0x8] sm:$0xff]
        %v336 = vpack.c.bf16 %v334, %v334
        %v337 = vpack.c.bf16 %v335, %v335
        %v338 = vld [vmem:[#allocation2] sm:$0xff]
        %v339 = vld [vmem:[%s325] sm:$0xf]
        %v340 = vld [vmem:[%s325 + $0x4] sm:$0xf]
        %v341 = vld [vmem:[%s325 + $0x8] sm:$0xf]
        %v342 = vld [vmem:[%s325 + $0xc] sm:$0xf]
        %v343 = vld [vmem:[%s325 + $0x10] sm:$0xf]
        %v344 = vld [vmem:[%s325 + $0x14] sm:$0xf]
        %v345 = vld [vmem:[%s325 + $0x18] sm:$0xf]
        %v346 = vld [vmem:[%s325 + $0x1c] sm:$0xf]
        %v347 = vld [vmem:[%s325 + $0x20] sm:$0xf]
        %v348 = vld [vmem:[%s325 + $0x24] sm:$0xf]
        %v349 = vld [vmem:[%s325 + $0x28] sm:$0xf]
        %v350 = vld [vmem:[%s325 + $0x2c] sm:$0xf]
        %v351 = vld [vmem:[%s325 + $0x30] sm:$0xf]
        %v352 = vld [vmem:[%s325 + $0x34] sm:$0xf]
        %v353 = vld [vmem:[%s325 + $0x38] sm:$0xf]
        %v354 = vld [vmem:[%s325 + $0x3c] sm:$0xf]
        %v355 = vld [vmem:[%s325 + $0x40] sm:$0xf]
        %v356 = vld [vmem:[%s325 + $0x44] sm:$0xf]
        %v357 = vld [vmem:[%s325 + $0x48] sm:$0xf]
        %v358 = vld [vmem:[%s325 + $0x4c] sm:$0xf]
        %v359 = vld [vmem:[%s325 + $0x50] sm:$0xf]
        %v360 = vld [vmem:[%s325 + $0x54] sm:$0xf]
        %v361 = vld [vmem:[%s325 + $0x58] sm:$0xf]
        %v362 = vld [vmem:[%s325 + $0x5c] sm:$0xf]
        %v363 = vld [vmem:[%s325 + $0x60] sm:$0xf]
        %v364 = vld [vmem:[%s325 + $0x64] sm:$0xf]
        %v365 = vld [vmem:[%s325 + $0x68] sm:$0xf]
        %v366 = vld [vmem:[%s325 + $0x6c] sm:$0xf]
        %v367 = vld [vmem:[%s325 + $0x70] sm:$0xf]
        %v368 = vld [vmem:[%s325 + $0x74] sm:$0xf]
        %v369 = vld [vmem:[%s325 + $0x78] sm:$0xf]
        %v370 = vld [vmem:[%s325 + $0x7c] sm:$0xf]
        %v403 = vunpack.c.l.b16 %v339
        %v404 = vunpack.c.l.b16 %v340
        %v405 = vunpack.c.l.b16 %v341
        %v406 = vunpack.c.l.b16 %v342
        %v407 = vunpack.c.l.b16 %v343
        %v408 = vunpack.c.l.b16 %v344
        %v409 = vunpack.c.l.b16 %v345
        %v410 = vunpack.c.l.b16 %v346
        %v411 = vunpack.c.l.b16 %v347
        %v412 = vunpack.c.l.b16 %v348
        %v413 = vunpack.c.l.b16 %v349
        %v414 = vunpack.c.l.b16 %v350
        %v415 = vunpack.c.l.b16 %v351
        %v416 = vunpack.c.l.b16 %v352
        %v417 = vunpack.c.l.b16 %v353
        %v418 = vunpack.c.l.b16 %v354
        %v419 = vunpack.c.l.b16 %v355
        %v420 = vunpack.c.l.b16 %v356
        %v421 = vunpack.c.l.b16 %v357
        %v422 = vunpack.c.l.b16 %v358
        %v423 = vunpack.c.l.b16 %v359
        %v424 = vunpack.c.l.b16 %v360
        %v425 = vunpack.c.l.b16 %v361
        %v426 = vunpack.c.l.b16 %v362
        %v427 = vunpack.c.l.b16 %v363
        %v428 = vunpack.c.l.b16 %v364
        %v429 = vunpack.c.l.b16 %v365
        %v430 = vunpack.c.l.b16 %v366
        %v431 = vunpack.c.l.b16 %v367
        %v432 = vunpack.c.l.b16 %v368
        %v433 = vunpack.c.l.b16 %v369
        %v434 = vunpack.c.l.b16 %v370
        %v435 = vpack.c.b16 %v404, %v403
        %v436 = vpack.c.b16 %v406, %v405
        %v437 = vpack.c.b16 %v408, %v407
        %v438 = vpack.c.b16 %v410, %v409
        %v439 = vpack.c.b16 %v412, %v411
        %v440 = vpack.c.b16 %v414, %v413
        %v441 = vpack.c.b16 %v416, %v415
        %v442 = vpack.c.b16 %v418, %v417
        %v443 = vpack.c.b16 %v420, %v419
        %v444 = vpack.c.b16 %v422, %v421
        %v445 = vpack.c.b16 %v424, %v423
        %v446 = vpack.c.b16 %v426, %v425
        %v447 = vpack.c.b16 %v428, %v427
        %v448 = vpack.c.b16 %v430, %v429
        %v449 = vpack.c.b16 %v432, %v431
        %v450 = vpack.c.b16 %v434, %v433
        %467 = vmatprep.subr.bf16.mxu0 0
        %468 = vmatpush1.bf16.msra.mxu0 %v435
        %469 = vmatprep.subr.bf16.mxu0 0
        %470 = vmatpush1.bf16.msra.mxu0 %v436
        %471 = vmatprep.subr.bf16.mxu0 0
        %472 = vmatpush1.bf16.msra.mxu0 %v437
        %473 = vmatprep.subr.bf16.mxu0 0
        %474 = vmatpush1.bf16.msra.mxu0 %v438
        %475 = vmatprep.subr.bf16.mxu0 0
        %476 = vmatpush1.bf16.msra.mxu0 %v439
        %477 = vmatprep.subr.bf16.mxu0 0
        %478 = vmatpush1.bf16.msra.mxu0 %v440
        %479 = vmatprep.subr.bf16.mxu0 0
        %480 = vmatpush1.bf16.msra.mxu0 %v441
        %481 = vmatprep.subr.bf16.mxu0 0
        %482 = vmatpush1.bf16.msra.mxu0 %v442
        %483 = vmatprep.subr.bf16.mxu0 0
        %484 = vmatpush1.bf16.msra.mxu0 %v443
        %485 = vmatprep.subr.bf16.mxu0 0
        %486 = vmatpush1.bf16.msra.mxu0 %v444
        %487 = vmatprep.subr.bf16.mxu0 0
        %488 = vmatpush1.bf16.msra.mxu0 %v445
        %489 = vmatprep.subr.bf16.mxu0 0
        %490 = vmatpush1.bf16.msra.mxu0 %v446
        %491 = vmatprep.subr.bf16.mxu0 0
        %492 = vmatpush1.bf16.msra.mxu0 %v447
        %493 = vmatprep.subr.bf16.mxu0 0
        %494 = vmatpush1.bf16.msra.mxu0 %v448
        %495 = vmatprep.subr.bf16.mxu0 0
        %496 = vmatpush1.bf16.msra.mxu0 %v449
        %497 = vmatprep.subr.bf16.mxu0 0
        %498 = vmatpush1.bf16.msra.mxu0 %v450
        %499 = vmatprep.mubr.bf16.mxu0 %v337
        %500 = vmatmul.mubr.bf16.gmra.mrb[0].mxu0 %v336
        %v501 = vpop.f32.mrb[0].mxu0
        %v502 = vadd.f32 0.0, %v501
        %v503 = vpop.f32.mrb[0].mxu0
        %v504 = vpop.f32.mrb[0].mxu0
        %v505 = vpop.f32.mrb[0].mxu0
        %506 = vdwg.mxu0
        %v507 = vadd.f32 %v338, %v502
        %vm508 = vcmask 523264
        %509 = vst.msk [vmem:[#allocation2] sm:$0xff] %vm508, %v507
        %p510 = scmp.eq.s32.totalorder %s26, 1
        // Predicated region
        $region53: #{tpu_custom_call.1} parent=47 // pred_check
          %p511 = pneg %p510
        $region54: #{tpu_custom_call.1} parent=47 // pred_check_branch
          %513 = sbr.rel (%p511) target = $region56
        $region55: #{tpu_custom_call.1} parent=47 // pred_region
          %v514 = vld [vmem:[#allocation2] sm:$0xff]
          %v515 = vld [vmem:[%s2] sm:$0x1]
          %v517 = vlaneseq
          %v518 = vshrl.u32 %v517, 7
          %v519 = vsub.s32 0, %v518
          %v520 = vrot.slane %v515, %v519
          %v522 = vadd.f32 %v514, %v520
          %v523 = vtanh.pop %v522
          %v524 = vld [vmem:[%s3] sm:$0xff]
          %v525 = vld [vmem:[%s3 + $0x8] sm:$0xff]
          %v526 = vld [vmem:[%s3 + $0x10] sm:$0xff]
          %v527 = vld [vmem:[%s3 + $0x18] sm:$0xff]
          %v528 = vld [vmem:[%s3 + $0x20] sm:$0xff]
          %v529 = vld [vmem:[%s3 + $0x28] sm:$0xff]
          %v530 = vld [vmem:[%s3 + $0x30] sm:$0xff]
          %v531 = vld [vmem:[%s3 + $0x38] sm:$0xff]
          %v532 = vld [vmem:[%s4] sm:$0x1]
          %v534 = vlaneseq
          %v535 = vshrl.u32 %v534, 7
          %v536 = vsub.s32 0, %v535
          %v537 = vrot.slane %v532, %v536
          %v540 = vsel %vm508, %v523, 0
          %542 = vmatprep.subr.mxu0 0.0
          %543 = vmatpush1.msra.mxu0 %v524
          %544 = vmatprep.subr.mxu0 0.0
          %545 = vmatpush1.msra.mxu0 %v525
          %546 = vmatprep.subr.mxu0 0.0
          %547 = vmatpush1.msra.mxu0 %v526
          %548 = vmatprep.subr.mxu0 0.0
          %549 = vmatpush1.msra.mxu0 %v527
          %550 = vmatprep.subr.mxu0 0.0
          %551 = vmatpush1.msra.mxu0 %v528
          %552 = vmatprep.subr.mxu0 0.0
          %553 = vmatpush1.msra.mxu0 %v529
          %554 = vmatprep.subr.mxu0 0.0
          %555 = vmatpush1.msra.mxu0 %v530
          %556 = vmatprep.subr.mxu0 0.0
          %557 = vmatpush1.msra.mxu0 %v531
          %558 = vmatprep.subr.mxu0 0.0
          %559 = vmatpush1.msra.mxu0 0.0
          %560 = vmatprep.subr.mxu0 0.0
          %561 = vmatpush1.msra.mxu0 0.0
          %562 = vmatprep.subr.mxu0 0.0
          %563 = vmatpush1.msra.mxu0 0.0
          %564 = vmatprep.subr.mxu0 0.0
          %565 = vmatpush1.msra.mxu0 0.0
          %566 = vmatprep.subr.mxu0 0.0
          %567 = vmatpush1.msra.mxu0 0.0
          %568 = vmatprep.subr.mxu0 0.0
          %569 = vmatpush1.msra.mxu0 0.0
          %570 = vmatprep.subr.mxu0 0.0
          %571 = vmatpush1.msra.mxu0 0.0
          %572 = vmatprep.subr.mxu0 0.0
          %573 = vmatpush1.msra.mxu0 0.0
          %574 = vmatprep.subr.mxu0 0.0
          %575 = vmatpush1.msra.mxu0 0.0
          %576 = vmatprep.subr.mxu0 0.0
          %577 = vmatpush1.msra.mxu0 0.0
          %578 = vmatprep.subr.mxu0 0.0
          %579 = vmatpush1.msra.mxu0 0.0
          %580 = vmatprep.subr.mxu0 0.0
          %581 = vmatpush1.msra.mxu0 0.0
          %582 = vmatprep.subr.mxu0 0.0
          %583 = vmatpush1.msra.mxu0 0.0
          %584 = vmatprep.subr.mxu0 0.0
          %585 = vmatpush1.msra.mxu0 0.0
          %586 = vmatprep.subr.mxu0 0.0
          %587 = vmatpush1.msra.mxu0 0.0
          %588 = vmatprep.subr.mxu0 0.0
          %589 = vmatpush1.msra.mxu0 0.0
          %590 = vmatprep.subr.mxu0 0.0
          %591 = vmatpush1.msra.mxu0 0.0
          %592 = vmatprep.subr.mxu0 0.0
          %593 = vmatpush1.msra.mxu0 0.0
          %594 = vmatprep.subr.mxu0 0.0
          %595 = vmatpush1.msra.mxu0 0.0
          %596 = vmatprep.subr.mxu0 0.0
          %597 = vmatpush1.msra.mxu0 0.0
          %598 = vmatprep.subr.mxu0 0.0
          %599 = vmatpush1.msra.mxu0 0.0
          %600 = vmatprep.subr.mxu0 0.0
          %601 = vmatpush1.msra.mxu0 0.0
          %602 = vmatprep.subr.mxu0 0.0
          %603 = vmatpush1.msra.mxu0 0.0
          %604 = vmatprep.subr.mxu0 0.0
          %605 = vmatpush1.msra.mxu0 0.0
          %606 = vmatprep.mubr.f32.mxu0 0.0
          %607 = vmatmul.mubr.f32.gmra.mrb[0].mxu0 %v540
          %v608 = vpop.f32.mrb[0].mxu0
          %v609 = vadd.f32 %v537, %v608
          %v610 = vpop.f32.mrb[0].mxu0
          %611 = vdwg.mxu0
          %v612 = vtanh.pop %v609
          %v613 = vld [vmem:[%s5] sm:$0xff]
          %v614 = vld [vmem:[%s5 + $0x8] sm:$0xff]
          %v615 = vld [vmem:[%s5 + $0x10] sm:$0xff]
          %v616 = vld [vmem:[%s5 + $0x18] sm:$0xff]
          %v617 = vld [vmem:[%s5 + $0x20] sm:$0xff]
          %v618 = vld [vmem:[%s5 + $0x28] sm:$0xff]
          %v619 = vld [vmem:[%s5 + $0x30] sm:$0xff]
          %v620 = vld [vmem:[%s5 + $0x38] sm:$0xff]
          %v621 = vld [vmem:[%s6] sm:$0x1]
          %v623 = vlaneseq
          %v624 = vshrl.u32 %v623, 7
          %v625 = vsub.s32 0, %v624
          %v626 = vrot.slane %v621, %v625
          %v629 = vsel %vm508, %v612, 0
          %631 = vmatprep.subr.mxu0 0.0
          %632 = vmatpush1.msra.mxu0 %v613
          %633 = vmatprep.subr.mxu0 0.0
          %634 = vmatpush1.msra.mxu0 %v614
          %635 = vmatprep.subr.mxu0 0.0
          %636 = vmatpush1.msra.mxu0 %v615
          %637 = vmatprep.subr.mxu0 0.0
          %638 = vmatpush1.msra.mxu0 %v616
          %639 = vmatprep.subr.mxu0 0.0
          %640 = vmatpush1.msra.mxu0 %v617
          %641 = vmatprep.subr.mxu0 0.0
          %642 = vmatpush1.msra.mxu0 %v618
          %643 = vmatprep.subr.mxu0 0.0
          %644 = vmatpush1.msra.mxu0 %v619
          %645 = vmatprep.subr.mxu0 0.0
          %646 = vmatpush1.msra.mxu0 %v620
          %647 = vmatprep.subr.mxu0 0.0
          %648 = vmatpush1.msra.mxu0 0.0
          %649 = vmatprep.subr.mxu0 0.0
          %650 = vmatpush1.msra.mxu0 0.0
          %651 = vmatprep.subr.mxu0 0.0
          %652 = vmatpush1.msra.mxu0 0.0
          %653 = vmatprep.subr.mxu0 0.0
          %654 = vmatpush1.msra.mxu0 0.0
          %655 = vmatprep.subr.mxu0 0.0
          %656 = vmatpush1.msra.mxu0 0.0
          %657 = vmatprep.subr.mxu0 0.0
          %658 = vmatpush1.msra.mxu0 0.0
          %659 = vmatprep.subr.mxu0 0.0
          %660 = vmatpush1.msra.mxu0 0.0
          %661 = vmatprep.subr.mxu0 0.0
          %662 = vmatpush1.msra.mxu0 0.0
          %663 = vmatprep.subr.mxu0 0.0
          %664 = vmatpush1.msra.mxu0 0.0
          %665 = vmatprep.subr.mxu0 0.0
          %666 = vmatpush1.msra.mxu0 0.0
          %667 = vmatprep.subr.mxu0 0.0
          %668 = vmatpush1.msra.mxu0 0.0
          %669 = vmatprep.subr.mxu0 0.0
          %670 = vmatpush1.msra.mxu0 0.0
          %671 = vmatprep.subr.mxu0 0.0
          %672 = vmatpush1.msra.mxu0 0.0
          %673 = vmatprep.subr.mxu0 0.0
          %674 = vmatpush1.msra.mxu0 0.0
          %675 = vmatprep.subr.mxu0 0.0
          %676 = vmatpush1.msra.mxu0 0.0
          %677 = vmatprep.subr.mxu0 0.0
          %678 = vmatpush1.msra.mxu0 0.0
          %679 = vmatprep.subr.mxu0 0.0
          %680 = vmatpush1.msra.mxu0 0.0
          %681 = vmatprep.subr.mxu0 0.0
          %682 = vmatpush1.msra.mxu0 0.0
          %683 = vmatprep.subr.mxu0 0.0
          %684 = vmatpush1.msra.mxu0 0.0
          %685 = vmatprep.subr.mxu0 0.0
          %686 = vmatpush1.msra.mxu0 0.0
          %687 = vmatprep.subr.mxu0 0.0
          %688 = vmatpush1.msra.mxu0 0.0
          %689 = vmatprep.subr.mxu0 0.0
          %690 = vmatpush1.msra.mxu0 0.0
          %691 = vmatprep.subr.mxu0 0.0
          %692 = vmatpush1.msra.mxu0 0.0
          %693 = vmatprep.subr.mxu0 0.0
          %694 = vmatpush1.msra.mxu0 0.0
          %695 = vmatprep.mubr.f32.mxu0 0.0
          %696 = vmatmul.mubr.f32.gmra.mrb[0].mxu0 %v629
          %v697 = vpop.f32.mrb[0].mxu0
          %v698 = vadd.f32 %v626, %v697
          %v699 = vpop.f32.mrb[0].mxu0
          %700 = vdwg.mxu0
          %vm701 = vcmp.ge.f32.partialorder %v698, -100.0
          %v702 = vsel %vm701, %v698, -100.0
          %vm703 = vcmp.le.f32.partialorder %v702, 100.0
          %v704 = vsel %vm703, %v702, 100.0
          %v705 = vadd.f32 %v704, 1.0
          %v706 = vmul.f32 %v698, %v698
          %708 = vrot.lane.b32.xlu0 %v706, 16
          %v709 = vpop.permute.xlu0 %708
          %v711 = vsub.f32 %v705, %v709
          %v712 = vmul.f32 %v704, 1.442695
          %v713 = vpow.pop %v712
          %v714 = vsub.f32 %v711, %v713
          %716 = vrot.lane.b32.xlu0 %v714, 112
          %v717 = vpop.permute.xlu0 %716
          %vm719 = vcmask 130048
          %v720 = vsel %vm719, %v717, 0.0
          %721 = vadd.xlane.f32.xlu0 %v720
          %v722 = vpop.xlane.xlu0 %721
          %v723 = vmul.f32 %v722, -0.5
          %v724 = vsel %vm719, %v698, -inf
          %725 = vmax.xlane.f32.xlu0 %v724
          %v726 = vpop.xlane.xlu0 %725
          %v727 = vsub.f32 %v698, %v726
          %v728 = vmul.f32 %v727, 1.442695
          %v729 = vpow.pop %v728
          %v730 = vsel %vm719, %v729, 0.0
          %731 = vadd.xlane.f32.xlu0 %v730
          %v732 = vpop.xlane.xlu0 %731
          %v733 = vrcp.pop %v732
          %v734 = vmul.f32 %v729, %v733
          %v735 = vsel %vm719, %v734, %v723
          %736 = vst [vmem:[%s310] sm:$0xff] %v735
        $region56: #{tpu_custom_call.1} parent=47 // pred_fallthru
          _
        %s737 = sand.u32 %s200, 1
        %s738 = scalar_lea.sflag [#allocation4], %s737
        %s739 = sand.u32 %s200, 1
        %s740 = smul.addr %s739, 8
        %s741 = scalar_lea.vmem [#allocation3], %s740
        // Predicated region
        $region57: #{tpu_custom_call.1} parent=47 // pred_check
          %p742 = pneg %p210
        $region58: #{tpu_custom_call.1} parent=47 // pred_check_branch
          %744 = sbr.rel (%p742) target = $region60
        $region59: #{tpu_custom_call.1} parent=47 // pred_region
          %s746 = ssub.s32 128, 128
          %747 = vsyncadd %s738, %s746
          %s748 = smul.addr %s25, 128
          %s749 = scalar_lea.hbm %s7, %s748
          %s751 = sshll.u32 %s741, 4
          %s752 = int_to_ptr.vmem [resolvable:$true] %s751
          %754 = dma.vmem_to_hbm [thread:$0]  %s752, 128, %s749, %s738
        $region60: #{tpu_custom_call.1} parent=47 // pred_fallthru
          _
      $region48: #{tpu_custom_call.1} parent=5 // pred_fallthru
        _
      %p755 = scmp.le.s32.totalorder 2, %s16
      // Predicated region
      $region61: #{tpu_custom_call.1} parent=5 // pred_check
        %p756 = pneg %p755
      $region62: #{tpu_custom_call.1} parent=5 // pred_check_branch
        %758 = sbr.rel (%p756) target = $region64
      $region63: #{tpu_custom_call.1} parent=5 // pred_region
        %s759 = ssub.s32 %s16, 2
        // Predicated region
        $region65: #{tpu_custom_call.1} parent=63 // pred_check
          %p760 = pneg %p216
        $region66: #{tpu_custom_call.1} parent=63 // pred_check_branch
          %762 = sbr.rel (%p760) target = $region68
        $region67: #{tpu_custom_call.1} parent=63 // pred_region
          %s763 = sand.u32 %s201, 1
          %s764 = scalar_lea.sflag [#allocation4], %s763
          %s765 = sand.u32 %s201, 1
          %s766 = smul.addr %s765, 8
          %s767 = scalar_lea.vmem [#allocation3], %s766
          %768 = dma.done %s764, 128
        $region68: #{tpu_custom_call.1} parent=63 // pred_fallthru
          _
      $region64: #{tpu_custom_call.1} parent=5 // pred_fallthru
        _
    $region6: #{tpu_custom_call.1} parent=1 // loop_footer
      %s20 = sadd.s32 1, %s16
    $region7: #{tpu_custom_call.1} parent=1 // loop_footer_branch
      %15 = sbr.rel target = $region3
    $region8: #{tpu_custom_call.1} parent=1 // loop_exit
      _
    %769 = vsyncpa [#allocation4], 1
    %s770 = scalar_lea.sflag [#allocation4], 1
    %771 = vsyncpa %s770, 1

</llo_original>
